<compile_context>
chip_gen: v7x
topology: tpu7x:2x2x1
jax: 0.10.0
libtpu: 0.0.40
codegen_flags: <defaults>
</compile_context>

<pallas_src>
import functools
import math

import jax
import jax.numpy as jnp
import numpy as np
from jax.experimental import pallas as pl
from jax.experimental.pallas import tpu as pltpu

EMB_DIM = 32   # embed_dim (query / output dim)
KV_DIM = 16    # kdim == vdim
N_HEAD = 2
HEAD_DIM = EMB_DIM // N_HEAD
SCALE = 1.0 / math.sqrt(HEAD_DIM)

PACK = 128 // KV_DIM          # 8 nodes packed per lane-dense row
PACK_IN = PACK * KV_DIM       # 128 : packed input lane width
PACK_OUT = PACK * EMB_DIM     # 256 : packed output lane width


def _round_up(x, m):
    return (x + m - 1) // m * m


def _jump_attn_kernel(w_ref, b_ref, msg_ref, out_ref):
    # (tr, 128) @ (128, 256) + (1, 256) -> (tr, 256)
    # Full 128/256-lane loads and stores; one MXU matmul per tile.
    out_ref[...] = (
        jnp.dot(msg_ref[...], w_ref[...], preferred_element_type=jnp.float32)
        + b_ref[...]
    ).astype(out_ref.dtype)


@functools.partial(jax.jit, static_argnames=("tn",))
def jump_attn_agger_forward(left_mem, msg, delta_ts, params, *, tn=32768):
    """Pallas equivalent of jump_attn_agger.forward (eval mode).

    left_mem and delta_ts do not affect the output (softmax over the length-1
    source is exactly 1); they are accepted for API fidelity but never read.
    `tn` is the node tile (default 32768; going much larger may require raising
    vmem_limit_bytes on v5e).
    """
    del delta_ts
    wqT, wkT, wvT, woT, bq, bk, bv, bo = params
    del wqT, wkT, bq, bk, left_mem      # q/k path never influences the output

    N, Dk = msg.shape
    E = woT.shape[-1]
    assert Dk == KV_DIM and E == EMB_DIM

    # One-time constant folding (tiny, O(128*256)):
    wf = wvT @ woT                                          # (16, 32) fused weight
    w_big = jnp.kron(jnp.eye(PACK, dtype=wf.dtype), wf)     # (128, 256) block-diagonal
    b_big = jnp.tile(bv @ woT + bo, (1, PACK))              # (1, 256) lane-dense bias

    # Zero-copy packed layout: 8 consecutive nodes per lane-dense row.
    n_pad = _round_up(N, PACK)
    if n_pad != N:
        # TODO(synk): ragged tail (<8 nodes) needs one small pad pass; rare in practice.
        msg = jnp.pad(msg, ((0, n_pad - N), (0, 0)))
    R = n_pad // PACK
    msg_p = msg.reshape(R, PACK_IN)     # free reshape of contiguous row-major memory

    # Tile selection (packed rows): as big as possible, multiple of 8,
    # but keep >= 2 grid steps so both v7x TensorCores get "parallel" work.
    tr = max(8, _round_up(pl.cdiv(max(tn, PACK), PACK), 8))
    if R <= 8:
        tr = R                                      # full-extent block (tiny problem)
    else:
        tr = min(tr, _round_up(R, 8))
        if pl.cdiv(R, tr) < 2:
            tr = _round_up(pl.cdiv(R, 2), 8)
    grid = pl.cdiv(R, tr)                           # ragged last block masked by Pallas

    out_p = pl.pallas_call(
        _jump_attn_kernel,
        out_shape=jax.ShapeDtypeStruct((R, PACK_OUT), msg.dtype),
        grid=(grid,),
        in_specs=[
            pl.BlockSpec((PACK_IN, PACK_OUT), lambda i: (0, 0)),  # block-diag weight (resident)
            pl.BlockSpec((1, PACK_OUT), lambda i: (0, 0)),        # lane-dense fused bias
            pl.BlockSpec((tr, PACK_IN), lambda i: (i, 0)),        # packed msg rows
        ],
        out_specs=pl.BlockSpec((tr, PACK_OUT), lambda i: (i, 0)),
        compiler_params=pltpu.CompilerParams(dimension_semantics=("parallel",)),
    )(w_big, b_big, msg_p)

    out = out_p.reshape(n_pad, E)       # free reshape back to node-major (N, emb_dim)
    return out[:N] if n_pad != N else out


def init_params(key):
    """Deterministic synthetic weights matching nn.MultiheadAttention(kdim!=embed_dim)."""
    ks = jax.random.split(key, 8)
    wq = jax.random.normal(ks[0], (EMB_DIM, EMB_DIM), jnp.float32) * (1.0 / math.sqrt(EMB_DIM))
    wk = jax.random.normal(ks[1], (EMB_DIM, KV_DIM), jnp.float32) * (1.0 / math.sqrt(KV_DIM))
    wv = jax.random.normal(ks[2], (EMB_DIM, KV_DIM), jnp.float32) * (1.0 / math.sqrt(KV_DIM))
    wo = jax.random.normal(ks[3], (EMB_DIM, EMB_DIM), jnp.float32) * (1.0 / math.sqrt(EMB_DIM))
    bq = jax.random.normal(ks[4], (1, EMB_DIM), jnp.float32) * 0.02
    bk = jax.random.normal(ks[5], (1, EMB_DIM), jnp.float32) * 0.02
    bv = jax.random.normal(ks[6], (1, EMB_DIM), jnp.float32) * 0.02
    bo = jax.random.normal(ks[7], (1, EMB_DIM), jnp.float32) * 0.02
    # pre-transposed weights so x @ W^T is a plain matmul
    return (wq.T, wk.T, wv.T, wo.T, bq, bk, bv, bo)


def reference_forward(left_mem, msg, params):
    """Pure-JAX mirror of the FULL torch MHA path (L=S=1), for sanity check."""
    wqT, wkT, wvT, woT, bq, bk, bv, bo = params
    q = (left_mem @ wqT + bq) * SCALE
    k = msg @ wkT + bk
    v = msg @ wvT + bv
    N = left_mem.shape[0]
    qh = q.reshape(N, N_HEAD, HEAD_DIM)
    kh = k.reshape(N, N_HEAD, HEAD_DIM)
    vh = v.reshape(N, N_HEAD, HEAD_DIM)
    logits = jnp.sum(qh * kh, axis=-1, keepdims=True)[..., None]   # (N, H, 1, 1)
    w = jax.nn.softmax(logits, axis=-1)                            # == 1 (length-1 source)
    attn = (w[..., 0] * vh).reshape(N, EMB_DIM)
    return attn @ woT + bo


if __name__ == "__main__":
    key = jax.random.PRNGKey(0)
    k_p, k_lm, k_msg, k_dt = jax.random.split(key, 4)

    N = 256  # number of nodes (torch "batch" after unsqueeze(0)); small demo size
    params = init_params(k_p)
    left_mem = jax.random.normal(k_lm, (N, EMB_DIM), jnp.float32)
    msg = jax.random.normal(k_msg, (N, KV_DIM), jnp.float32)
    delta_ts = jax.random.uniform(k_dt, (N,), jnp.float32)

    # Default tn=32768; at N=256 the tile-selection logic automatically splits the
    # 32 packed rows into a 2-step "parallel" grid (both v7x TensorCores busy).
    out = jump_attn_agger_forward(left_mem, msg, delta_ts, params)
    out = jax.block_until_ready(out)

    ref = reference_forward(left_mem, msg, params)
    assert out.shape == (N, EMB_DIM)
    np.testing.assert_allclose(np.asarray(out), np.asarray(ref), atol=1e-4, rtol=1e-4)

    print("KERNEL_OK")
</pallas_src>

<mosaic_0001>
module attributes {stable_mosaic.version = 11 : i64} {
  func.func @_jump_attn_kernel(%arg0: i32, %arg1: memref<128x256xf32, #tpu.memory_space<vmem>>, %arg2: memref<1x256xf32, #tpu.memory_space<vmem>>, %arg3: memref<16x128xf32, #tpu.memory_space<vmem>>, %arg4: memref<16x256xf32, #tpu.memory_space<vmem>>) attributes {dimension_semantics = [#tpu.dimension_semantics<parallel>], iteration_bounds = array<i64: 2>, scalar_prefetch = 0 : i64, scratch_operands = 0 : i64, tpu.core_type = #tpu.core_type<tc>, window_params = [{pipeline_mode = #tpu.pipeline_mode<synchronous>, transform_indices = @transform_0, window_bounds = array<i64: 128, 256>}, {pipeline_mode = #tpu.pipeline_mode<synchronous>, transform_indices = @transform_1, window_bounds = array<i64: 1, 256>}, {transform_indices = @transform_2, window_bounds = array<i64: 16, 128>}, {transform_indices = @transform_3, window_bounds = array<i64: 16, 256>}]} {
    %c0 = arith.constant 0 : index
    %c0_0 = arith.constant 0 : index
    %0 = vector.load %arg3[%c0, %c0_0] : memref<16x128xf32, #tpu.memory_space<vmem>>, vector<16x128xf32>
    %c0_1 = arith.constant 0 : index
    %c0_2 = arith.constant 0 : index
    %1 = vector.load %arg1[%c0_1, %c0_2] : memref<128x256xf32, #tpu.memory_space<vmem>>, vector<128x256xf32>
    %cst = arith.constant dense<0.000000e+00> : vector<16x256xf32>
    %2 = tpu.matmul %0, %1, %cst {dimension_numbers = #tpu.dot_dimension_numbers<[1], [0], [0], [1], [0, 0, 1, 1], [], []>} : vector<16x128xf32>, vector<128x256xf32>, vector<16x256xf32> -> vector<16x256xf32>
    %c0_3 = arith.constant 0 : index
    %c0_4 = arith.constant 0 : index
    %3 = vector.load %arg2[%c0_3, %c0_4] : memref<1x256xf32, #tpu.memory_space<vmem>>, vector<1x256xf32>
    %4 = vector.broadcast %3 : vector<1x256xf32> to vector<16x256xf32>
    %5 = arith.addf %2, %4 : vector<16x256xf32>
    %c0_5 = arith.constant 0 : index
    %c0_6 = arith.constant 0 : index
    %6 = vector.load %arg4[%c0_5, %c0_6] : memref<16x256xf32, #tpu.memory_space<vmem>>, vector<16x256xf32>
    tpu.vector_store %arg4[%c0_5, %c0_6], %5 {strides = array<i32>} : memref<16x256xf32, #tpu.memory_space<vmem>>, vector<16x256xf32>,
    return
  }
  func.func @transform_0(%arg0: i32) -> (i32, i32) {
    %c0_i32 = arith.constant 0 : i32
    %c0_i32_0 = arith.constant 0 : i32
    %c0_i32_1 = arith.constant 0 : i32
    return %c0_i32, %c0_i32_0 : i32, i32
  }
  func.func @transform_1(%arg0: i32) -> (i32, i32) {
    %c0_i32 = arith.constant 0 : i32
    %c0_i32_0 = arith.constant 0 : i32
    %c0_i32_1 = arith.constant 0 : i32
    return %c0_i32, %c0_i32_0 : i32, i32
  }
  func.func @transform_2(%arg0: i32) -> (i32, i32) {
    %c0_i32 = arith.constant 0 : i32
    %c0_i32_0 = arith.constant 0 : i32
    return %arg0, %c0_i32 : i32, i32
  }
  func.func @transform_3(%arg0: i32) -> (i32, i32) {
    %c0_i32 = arith.constant 0 : i32
    %c0_i32_0 = arith.constant 0 : i32
    return %arg0, %c0_i32 : i32, i32
  }
}

</mosaic_0001>

<llo_original>
// kernel: jump_attn_agger_forward.1
$region0: #{jump_attn_agger_forward.1}
  #allocation0 [shape = 'u32[]', space=smem, size = 0x4, offset = 0x4, fixed_abs, tag = 'smem constant byte address 0x4 - core index']
  #allocation1 [shape = 'u32[144,128]{1,0:T(1,128)}', space=vmem, size = 0x12000, scoped, tag = 'internal scratch']
  %s0 = inlined_call_operand.vmem [shape: f32[128,256], index: 0, kind: input, shape index: {}]
  %s1 = inlined_call_operand.vmem [shape: f32[1,256], index: 1, kind: input, shape index: {}]
  %s2 = inlined_call_operand.vmem [shape: f32[32,128], index: 2, kind: input, shape index: {}]
  %s3 = inlined_call_operand.vmem [shape: f32[32,256], index: 3, kind: output, shape index: {}]
  %s4 = sld [smem:[#allocation0]]
  $region45: #{jump_attn_agger_forward.1} parent=0
    _
  %s6 = ssub.s32 1, %s4
  %s7 = scalar_select 0, %s6, %s4
  loop: start=0, step=1, limit=4
  $region2: #{jump_attn_agger_forward.1} parent=0 // loop_pre_header
    _
  $region3: #{jump_attn_agger_forward.1} parent=0 // loop_header
    %s9 = sphi 0, %s13
    %p10 = scmp.ge.s32.totalorder %s9, 4
    %s17 = sphi 0, %s17
    %s19 = sphi 0, %s17
    %s20 = sphi 0, %s19
    %s34 = sphi 0, %s20
    %s38 = sphi 0, %s38
    %s40 = sphi 0, %s38
    %s41 = sphi 0, %s40
    %s55 = sphi 0, %s41
    %s61 = sphi 0, %s63
    %s64 = sphi 0, %s61
    %s65 = sphi 0, %s64
    %s81 = sphi 0, %s65
    %s87 = sphi 0, %s89
    %s90 = sphi 0, %s87
    %s91 = sphi 0, %s90
    %s107 = sphi 0, %s91
  $region4: #{jump_attn_agger_forward.1} parent=0 // loop_header_branch
    %12 = sbr.rel (%p10) target = $region8
  $region5: #{jump_attn_agger_forward.1} parent=0 // loop_body
    %s14 = ssub.s32 %s9, 1
    %s15 = ssub.s32 %s9, 2
    %s16 = sadd.s32 %s9, 1
    %s18 = sadd.s32 %s17, 1
    %p21 = scmp.eq.s32.totalorder %s9, 1
    %p22 = scmp.ne.s32.totalorder %s17, %s19
    %p23 = scmp.eq.s32.totalorder %s9, 0
    %p24 = por %p22, %p23
    %p25 = scmp.ne.s32.totalorder %s17, %s19
    %p26 = scmp.eq.s32.totalorder %s14, 1
    %p27 = por %p25, %p26
    %p28 = scmp.ne.s32.totalorder %s19, %s20
    %p29 = scmp.eq.s32.totalorder %s14, 0
    %p30 = por %p28, %p29
    %p31 = scmp.ne.s32.totalorder %s19, %s20
    %p32 = scmp.eq.s32.totalorder %s15, 1
    %p33 = por %p31, %p32
    %p35 = scmp.ne.s32.totalorder %s20, %s34
    %p36 = scmp.eq.s32.totalorder %s15, 0
    %p37 = por %p35, %p36
    %s39 = sadd.s32 %s38, 1
    %p42 = scmp.eq.s32.totalorder %s9, 1
    %p43 = scmp.ne.s32.totalorder %s38, %s40
    %p44 = scmp.eq.s32.totalorder %s9, 0
    %p45 = por %p43, %p44
    %p46 = scmp.ne.s32.totalorder %s38, %s40
    %p47 = scmp.eq.s32.totalorder %s14, 1
    %p48 = por %p46, %p47
    %p49 = scmp.ne.s32.totalorder %s40, %s41
    %p50 = scmp.eq.s32.totalorder %s14, 0
    %p51 = por %p49, %p50
    %p52 = scmp.ne.s32.totalorder %s40, %s41
    %p53 = scmp.eq.s32.totalorder %s15, 1
    %p54 = por %p52, %p53
    %p56 = scmp.ne.s32.totalorder %s41, %s55
    %p57 = scmp.eq.s32.totalorder %s15, 0
    %p58 = por %p56, %p57
    %s59 = ssub.s32 %s9, %s16
    %p60 = scmp.eq.s32.totalorder %s59, 0
    %s62 = sadd.s32 %s61, 1
    %s63 = scalar_select %p60, %s61, %s62
    %p66 = pneg %p60
    %p67 = scmp.eq.s32.totalorder %s9, 1
    %p68 = por %p66, %p67
    %p69 = scmp.ne.s32.totalorder %s61, %s64
    %p70 = scmp.eq.s32.totalorder %s9, 0
    %p71 = por %p69, %p70
    %p72 = scmp.ne.s32.totalorder %s61, %s64
    %p73 = scmp.eq.s32.totalorder %s14, 1
    %p74 = por %p72, %p73
    %p75 = scmp.ne.s32.totalorder %s64, %s65
    %p76 = scmp.eq.s32.totalorder %s14, 0
    %p77 = por %p75, %p76
    %p78 = scmp.ne.s32.totalorder %s64, %s65
    %p79 = scmp.eq.s32.totalorder %s15, 1
    %p80 = por %p78, %p79
    %p82 = scmp.ne.s32.totalorder %s65, %s81
    %p83 = scmp.eq.s32.totalorder %s15, 0
    %p84 = por %p82, %p83
    %s85 = ssub.s32 %s9, %s16
    %p86 = scmp.eq.s32.totalorder %s85, 0
    %s88 = sadd.s32 %s87, 1
    %s89 = scalar_select %p86, %s87, %s88
    %p92 = pneg %p86
    %p93 = scmp.eq.s32.totalorder %s9, 1
    %p94 = por %p92, %p93
    %p95 = scmp.ne.s32.totalorder %s87, %s90
    %p96 = scmp.eq.s32.totalorder %s9, 0
    %p97 = por %p95, %p96
    %p98 = scmp.ne.s32.totalorder %s87, %s90
    %p99 = scmp.eq.s32.totalorder %s14, 1
    %p100 = por %p98, %p99
    %p101 = scmp.ne.s32.totalorder %s90, %s91
    %p102 = scmp.eq.s32.totalorder %s14, 0
    %p103 = por %p101, %p102
    %p104 = scmp.ne.s32.totalorder %s90, %s91
    %p105 = scmp.eq.s32.totalorder %s15, 1
    %p106 = por %p104, %p105
    %p108 = scmp.ne.s32.totalorder %s91, %s107
    %p109 = scmp.eq.s32.totalorder %s15, 0
    %p110 = por %p108, %p109
    %p111 = scmp.le.s32.totalorder 1, %s9
    %p112 = scmp.lt.s32.totalorder %s9, 3
    %p113 = pnand %p111, %p112
    %p114 = pneg %p113
    // Predicated region
    $region9: #{jump_attn_agger_forward.1} parent=5 // pred_check
      _
    $region10: #{jump_attn_agger_forward.1} parent=5 // pred_check_branch
      %116 = sbr.rel (%p113) target = $region12
    $region11: #{jump_attn_agger_forward.1} parent=5 // pred_region
      %s117 = ssub.s32 %s9, 1
      // Predicated region
      $region13: #{jump_attn_agger_forward.1} parent=11 // pred_check
        %p118 = pneg %p30
      $region14: #{jump_attn_agger_forward.1} parent=11 // pred_check_branch
        %120 = sbr.rel (%p118) target = $region16
      $region15: #{jump_attn_agger_forward.1} parent=11 // pred_region
        _
      $region16: #{jump_attn_agger_forward.1} parent=11 // pred_fallthru
        _
      // Predicated region
      $region17: #{jump_attn_agger_forward.1} parent=11 // pred_check
        %p121 = pneg %p51
      $region18: #{jump_attn_agger_forward.1} parent=11 // pred_check_branch
        %123 = sbr.rel (%p121) target = $region20
      $region19: #{jump_attn_agger_forward.1} parent=11 // pred_region
        _
      $region20: #{jump_attn_agger_forward.1} parent=11 // pred_fallthru
        _
    $region12: #{jump_attn_agger_forward.1} parent=5 // pred_fallthru
      _
    %p124 = scmp.lt.s32.totalorder %s9, 2
    // Predicated region
    $region21: #{jump_attn_agger_forward.1} parent=5 // pred_check
      %p125 = pneg %p124
    $region22: #{jump_attn_agger_forward.1} parent=5 // pred_check_branch
      %127 = sbr.rel (%p125) target = $region24
    $region23: #{jump_attn_agger_forward.1} parent=5 // pred_region
      // Predicated region
      $region25: #{jump_attn_agger_forward.1} parent=23 // pred_check
        %p128 = pneg %p71
      $region26: #{jump_attn_agger_forward.1} parent=23 // pred_check_branch
        %130 = sbr.rel (%p128) target = $region28
      $region27: #{jump_attn_agger_forward.1} parent=23 // pred_region
        %s131 = smul.u32 2, %s9
        %p132 = scmp.lt.s32.totalorder %s131, 3
        %s133 = scalar_select %p132, %s131, 3
        %s134 = smul.addr %s133, 8
        %s135 = scalar_lea.vmem %s2, %s134
        %s136 = smul.u32 2, %s9
      $region28: #{jump_attn_agger_forward.1} parent=23 // pred_fallthru
        _
    $region24: #{jump_attn_agger_forward.1} parent=5 // pred_fallthru
      _
    %p137 = scmp.le.s32.totalorder 1, %s9
    %p138 = scmp.lt.s32.totalorder %s9, 3
    %p139 = pnand %p137, %p138
    %p140 = pneg %p139
    // Predicated region
    $region29: #{jump_attn_agger_forward.1} parent=5 // pred_check
      _
    $region30: #{jump_attn_agger_forward.1} parent=5 // pred_check_branch
      %142 = sbr.rel (%p139) target = $region32
    $region31: #{jump_attn_agger_forward.1} parent=5 // pred_region
      %s143 = ssub.s32 %s9, 1
      %p144 = pneg %p30
      %p145 = pneg %p27
      %p146 = pneg %p51
      %p147 = pneg %p48
      %s148 = smul.u32 2, %s14
      %p149 = scmp.lt.s32.totalorder %s148, 3
      %s150 = scalar_select %p149, %s148, 3
      %s151 = smul.addr %s150, 8
      %s152 = scalar_lea.vmem %s2, %s151
      %p153 = pneg %p77
      %p154 = pneg %p74
      %p155 = pneg %p103
      %p156 = pneg %p100
      %s157 = smul.u32 2, %s14
      %p158 = scmp.lt.s32.totalorder %s157, 3
      %s159 = scalar_select %p158, %s157, 3
      %s160 = smul.addr %s159, 2
      %s161 = smul.addr %s160, 8
      %s162 = scalar_lea.vmem %s3, %s161
      %s163 = smul.u32 2, %s14
      %p164 = scmp.lt.s32.totalorder %s163, 3
      %s165 = scalar_select %p164, %s163, 3
      %s166 = smul.addr %s165, 8
      %s167 = scalar_lea.vmem %s2, %s166
      %s168 = smul.u32 2, %s14
      %s169 = smul.u32 2, %s14
      %p170 = scmp.lt.s32.totalorder %s169, 3
      %s171 = scalar_select %p170, %s169, 3
      %s172 = smul.addr %s171, 2
      %s173 = smul.addr %s172, 8
      %s174 = scalar_lea.vmem %s3, %s173
      %s175 = smul.u32 2, %s14
      %v176 = vld [vmem:[%s167] sm:$0xff]
      %v177 = vld [vmem:[%s167 + $0x8] sm:$0xff]
      %v178 = vld [vmem:[%s0] sm:$0xff]
      %v179 = vld [vmem:[%s0 + $0x8] sm:$0xff]
      %v180 = vld [vmem:[%s0 + $0x10] sm:$0xff]
      %v181 = vld [vmem:[%s0 + $0x18] sm:$0xff]
      %v182 = vld [vmem:[%s0 + $0x20] sm:$0xff]
      %v183 = vld [vmem:[%s0 + $0x28] sm:$0xff]
      %v184 = vld [vmem:[%s0 + $0x30] sm:$0xff]
      %v185 = vld [vmem:[%s0 + $0x38] sm:$0xff]
      %v186 = vld [vmem:[%s0 + $0x40] sm:$0xff]
      %v187 = vld [vmem:[%s0 + $0x48] sm:$0xff]
      %v188 = vld [vmem:[%s0 + $0x50] sm:$0xff]
      %v189 = vld [vmem:[%s0 + $0x58] sm:$0xff]
      %v190 = vld [vmem:[%s0 + $0x60] sm:$0xff]
      %v191 = vld [vmem:[%s0 + $0x68] sm:$0xff]
      %v192 = vld [vmem:[%s0 + $0x70] sm:$0xff]
      %v193 = vld [vmem:[%s0 + $0x78] sm:$0xff]
      %v194 = vld [vmem:[%s0 + $0x80] sm:$0xff]
      %v195 = vld [vmem:[%s0 + $0x88] sm:$0xff]
      %v196 = vld [vmem:[%s0 + $0x90] sm:$0xff]
      %v197 = vld [vmem:[%s0 + $0x98] sm:$0xff]
      %v198 = vld [vmem:[%s0 + $0xa0] sm:$0xff]
      %v199 = vld [vmem:[%s0 + $0xa8] sm:$0xff]
      %v200 = vld [vmem:[%s0 + $0xb0] sm:$0xff]
      %v201 = vld [vmem:[%s0 + $0xb8] sm:$0xff]
      %v202 = vld [vmem:[%s0 + $0xc0] sm:$0xff]
      %v203 = vld [vmem:[%s0 + $0xc8] sm:$0xff]
      %v204 = vld [vmem:[%s0 + $0xd0] sm:$0xff]
      %v205 = vld [vmem:[%s0 + $0xd8] sm:$0xff]
      %v206 = vld [vmem:[%s0 + $0xe0] sm:$0xff]
      %v207 = vld [vmem:[%s0 + $0xe8] sm:$0xff]
      %v208 = vld [vmem:[%s0 + $0xf0] sm:$0xff]
      %v209 = vld [vmem:[%s0 + $0xf8] sm:$0xff]
      %v210 = vld [vmem:[%s1] sm:$0x3]
      %v212 = vlaneseq
      %v213 = vshrl.u32 %v212, 7
      %v214 = vsub.s32 0, %v213
      %v215 = vrot.slane %v210, %v214
      %v216 = vlaneseq
      %v217 = vshrl.u32 %v216, 7
      %v218 = vsub.s32 1, %v217
      %v219 = vrot.slane %v210, %v218
      %222 = vmatprep.subr.mxu0 %v179
      %223 = vmatpush1.msra.mxu0 %v178
      %224 = vmatprep.subr.mxu0 %v181
      %225 = vmatpush1.msra.mxu0 %v180
      %226 = vmatprep.subr.mxu0 %v183
      %227 = vmatpush1.msra.mxu0 %v182
      %228 = vmatprep.subr.mxu0 %v185
      %229 = vmatpush1.msra.mxu0 %v184
      %230 = vmatprep.subr.mxu0 %v187
      %231 = vmatpush1.msra.mxu0 %v186
      %232 = vmatprep.subr.mxu0 %v189
      %233 = vmatpush1.msra.mxu0 %v188
      %234 = vmatprep.subr.mxu0 %v191
      %235 = vmatpush1.msra.mxu0 %v190
      %236 = vmatprep.subr.mxu0 %v193
      %237 = vmatpush1.msra.mxu0 %v192
      %238 = vmatprep.subr.mxu0 %v195
      %239 = vmatpush1.msra.mxu0 %v194
      %240 = vmatprep.subr.mxu0 %v197
      %241 = vmatpush1.msra.mxu0 %v196
      %242 = vmatprep.subr.mxu0 %v199
      %243 = vmatpush1.msra.mxu0 %v198
      %244 = vmatprep.subr.mxu0 %v201
      %245 = vmatpush1.msra.mxu0 %v200
      %246 = vmatprep.subr.mxu0 %v203
      %247 = vmatpush1.msra.mxu0 %v202
      %248 = vmatprep.subr.mxu0 %v205
      %249 = vmatpush1.msra.mxu0 %v204
      %250 = vmatprep.subr.mxu0 %v207
      %251 = vmatpush1.msra.mxu0 %v206
      %252 = vmatprep.subr.mxu0 %v209
      %253 = vmatpush1.msra.mxu0 %v208
      %254 = vmatprep.subr.mxu0 0.0
      %255 = vmatpush1.msra.mxu0 0.0
      %256 = vmatprep.subr.mxu0 0.0
      %257 = vmatpush1.msra.mxu0 0.0
      %258 = vmatprep.subr.mxu0 0.0
      %259 = vmatpush1.msra.mxu0 0.0
      %260 = vmatprep.subr.mxu0 0.0
      %261 = vmatpush1.msra.mxu0 0.0
      %262 = vmatprep.subr.mxu0 0.0
      %263 = vmatpush1.msra.mxu0 0.0
      %264 = vmatprep.subr.mxu0 0.0
      %265 = vmatpush1.msra.mxu0 0.0
      %266 = vmatprep.subr.mxu0 0.0
      %267 = vmatpush1.msra.mxu0 0.0
      %268 = vmatprep.subr.mxu0 0.0
      %269 = vmatpush1.msra.mxu0 0.0
      %270 = vmatprep.subr.mxu0 0.0
      %271 = vmatpush1.msra.mxu0 0.0
      %272 = vmatprep.subr.mxu0 0.0
      %273 = vmatpush1.msra.mxu0 0.0
      %274 = vmatprep.subr.mxu0 0.0
      %275 = vmatpush1.msra.mxu0 0.0
      %276 = vmatprep.subr.mxu0 0.0
      %277 = vmatpush1.msra.mxu0 0.0
      %278 = vmatprep.subr.mxu0 0.0
      %279 = vmatpush1.msra.mxu0 0.0
      %280 = vmatprep.subr.mxu0 0.0
      %281 = vmatpush1.msra.mxu0 0.0
      %282 = vmatprep.subr.mxu0 0.0
      %283 = vmatpush1.msra.mxu0 0.0
      %284 = vmatprep.subr.mxu0 0.0
      %285 = vmatpush1.msra.mxu0 0.0
      %286 = vmatprep.mubr.f32.mxu0 0.0
      %287 = vmatmul.mubr.f32.gmra.mrb[0].mxu0 %v176
      %v288 = vpop.f32.mrb[0].mxu0
      %v289 = vadd.f32 %v215, %v288
      %v290 = vpop.f32.mrb[0].mxu0
      %v291 = vadd.f32 %v219, %v290
      %292 = vmatprep.mubr.f32.mxu0 0.0
      %293 = vmatmul.mubr.f32.gmra.mrb[0].mxu0 %v177
      %v294 = vpop.f32.mrb[0].mxu0
      %v295 = vadd.f32 %v215, %v294
      %v296 = vpop.f32.mrb[0].mxu0
      %v297 = vadd.f32 %v219, %v296
      %298 = vdwg.mxu0
      %299 = vst [vmem:[%s174] sm:$0xff] %v289
      %300 = vst [vmem:[%s174 + $0x8] sm:$0xff] %v291
      %301 = vst [vmem:[%s174 + $0x10] sm:$0xff] %v295
      %302 = vst [vmem:[%s174 + $0x18] sm:$0xff] %v297
      %s303 = smul.u32 2, %s14
      %p304 = scmp.lt.s32.totalorder %s303, 3
      %s305 = scalar_select %p304, %s303, 3
      %s306 = smul.addr %s305, 2
      %s307 = smul.addr %s306, 8
      %s308 = scalar_lea.vmem %s3, %s307
      // Predicated region
      $region33: #{jump_attn_agger_forward.1} parent=31 // pred_check
        %p309 = pneg %p100
      $region34: #{jump_attn_agger_forward.1} parent=31 // pred_check_branch
        %311 = sbr.rel (%p309) target = $region36
      $region35: #{jump_attn_agger_forward.1} parent=31 // pred_region
        %s312 = smul.u32 2, %s14
      $region36: #{jump_attn_agger_forward.1} parent=31 // pred_fallthru
        _
    $region32: #{jump_attn_agger_forward.1} parent=5 // pred_fallthru
      _
    %p313 = scmp.le.s32.totalorder 2, %s9
    // Predicated region
    $region37: #{jump_attn_agger_forward.1} parent=5 // pred_check
      %p314 = pneg %p313
    $region38: #{jump_attn_agger_forward.1} parent=5 // pred_check_branch
      %316 = sbr.rel (%p314) target = $region40
    $region39: #{jump_attn_agger_forward.1} parent=5 // pred_region
      %s317 = ssub.s32 %s9, 2
      // Predicated region
      $region41: #{jump_attn_agger_forward.1} parent=39 // pred_check
        %p318 = pneg %p106
      $region42: #{jump_attn_agger_forward.1} parent=39 // pred_check_branch
        %320 = sbr.rel (%p318) target = $region44
      $region43: #{jump_attn_agger_forward.1} parent=39 // pred_region
        %s321 = smul.u32 2, %s15
        %p322 = scmp.lt.s32.totalorder %s321, 3
        %s323 = scalar_select %p322, %s321, 3
        %s324 = smul.addr %s323, 2
        %s325 = smul.addr %s324, 8
        %s326 = scalar_lea.vmem %s3, %s325
      $region44: #{jump_attn_agger_forward.1} parent=39 // pred_fallthru
        _
    $region40: #{jump_attn_agger_forward.1} parent=5 // pred_fallthru
      _
  $region6: #{jump_attn_agger_forward.1} parent=0 // loop_footer
    %s13 = sadd.s32 1, %s9
  $region7: #{jump_attn_agger_forward.1} parent=0 // loop_footer_branch
    %8 = sbr.rel target = $region3
  $region8: #{jump_attn_agger_forward.1} parent=0 // loop_exit
    _

</llo_original>
